<compile_context>
chip_gen: v5e
topology: v5e:2x2
jax: 0.10.0
libtpu: 0.0.40
codegen_flags: <defaults>
</compile_context>

<pallas_src>
import numpy as np
import jax
import jax.numpy as jnp
from jax import lax
from jax.experimental import pallas as pl
from jax.experimental.pallas import tpu as pltpu


def _round_up(x, m):
    return (x + m - 1) // m * m


# ----------------------------------------------------------------------------
# Fused kernel.  All per-frame tensors are (feature, tile_t) with T on lanes.
#   gbc      = [Wg;Wb;Wc] @ videos^T + [bg;bb;bc]        (3D, b_pad)
#   gbc[:2D] = tanh(gbc[:2D])                             gamma / beta rows
#   gbc_f    = gbc @ onehot(video_id)                     (3D, tile_t) gather
#   temp^T   = gbc_f[2D:3D]
#   pos^T    = Wa @ (gamma_f * frames^T + beta_f) + ba    (P, tile_t)
# ----------------------------------------------------------------------------
def _template_kernel(ids_ref, vT_ref, wgbc_ref, bgbc_ref, wa_ref, ba_ref,
                     fT_ref, posT_ref, tempT_ref):
    d = fT_ref.shape[0]          # hidden dim D
    b_pad = vT_ref.shape[1]      # padded number of videos
    t = fT_ref.shape[1]          # frame tile width (lanes)

    # --- per-video projections: one concatenated matmul ----------------------
    gbc = jnp.dot(wgbc_ref[...], vT_ref[...],
                  preferred_element_type=jnp.float32) + bgbc_ref[...]
    row = lax.broadcasted_iota(jnp.int32, gbc.shape, 0)
    gbc = jnp.where(row < 2 * d, jnp.tanh(gbc), gbc)   # tanh on gamma & beta only

    # --- in-kernel gather (video -> frame) via one-hot MXU matmul ------------
    ids = ids_ref[...]                                           # (1, t) int32
    vid = lax.broadcasted_iota(jnp.int32, (b_pad, t), 0)
    onehot = (vid == ids).astype(jnp.float32)                    # (b_pad, t)
    gbc_f = jnp.dot(gbc, onehot, preferred_element_type=jnp.float32)  # (3D, t)

    gamma_f = gbc_f[0:d, :]
    beta_f = gbc_f[d:2 * d, :]
    tempT_ref[...] = gbc_f[2 * d:3 * d, :]                       # content query

    # --- fused modulation + anchor projection (lane-dense output) ------------
    x = gamma_f * fT_ref[...] + beta_f                           # (D, t)
    posT_ref[...] = jnp.dot(wa_ref[...], x,
                            preferred_element_type=jnp.float32) + ba_ref[...]


# ----------------------------------------------------------------------------
# Wrapper: weight concat, transposed layout, padding, single pallas_call.
# ----------------------------------------------------------------------------
def template_generator_forward(frames_cls, videos_cls, durations, params,
                               tile_t=512):
    """frames_cls: (T, D) f32,  videos_cls: (b, D) f32,  durations: list[int]."""
    b = len(durations)
    T, D = frames_cls.shape
    P = params["Wa"].shape[0]

    # lane tiles must be multiples of 128; one big tile when T is small.
    tile_t = max(128, _round_up(min(tile_t, _round_up(T, 128)), 128))
    T_pad = _round_up(T, tile_t)
    b_pad = _round_up(b, 8)

    # weight prep (torch (out,in) layout used directly; could be cached)
    w_gbc = jnp.concatenate([params["Wg"], params["Wb"], params["Wc"]],
                            axis=0)                               # (3D, D)
    b_gbc = jnp.concatenate([params["bg"], params["bb"],
                             params["bc"]]).reshape(3 * D, 1)     # (3D, 1)
    wa = params["Wa"]                                             # (P, D)
    ba = params["ba"].reshape(P, 1)                               # (P, 1)

    # transposed (feature, rows) activations, zero padded
    frames_T = jnp.pad(frames_cls.T, ((0, 0), (0, T_pad - T)))    # (D, T_pad)
    videos_T = jnp.pad(videos_cls.T, ((0, 0), (0, b_pad - b)))    # (D, b_pad)

    # per-frame video id (durations are static host ints -> built at trace time)
    ids_np = np.repeat(np.arange(b, dtype=np.int32), np.asarray(durations))
    ids_np = np.pad(ids_np, (0, T_pad - T))
    ids = jnp.asarray(ids_np, dtype=jnp.int32).reshape(1, T_pad)

    grid = (T_pad // tile_t,)
    const = lambda shape: pl.BlockSpec(shape, lambda i: (0, 0))
    tiled = lambda rows: pl.BlockSpec((rows, tile_t), lambda i: (0, i))

    posT, tempT = pl.pallas_call(
        _template_kernel,
        out_shape=(jax.ShapeDtypeStruct((P, T_pad), jnp.float32),
                   jax.ShapeDtypeStruct((D, T_pad), jnp.float32)),
        grid=grid,
        in_specs=[tiled(1),                 # per-frame video ids   (1, tile_t)
                  const((D, b_pad)),        # videos^T
                  const((3 * D, D)),        # [Wg;Wb;Wc]
                  const((3 * D, 1)),        # [bg;bb;bc]
                  const((P, D)),            # Wa
                  const((P, 1)),            # ba
                  tiled(D)],                # frames^T              (D, tile_t)
        out_specs=(tiled(P), tiled(D)),
        compiler_params=pltpu.CompilerParams(
            dimension_semantics=("parallel",)),
    )(ids, videos_T, w_gbc, b_gbc, wa, ba, frames_T)

    pos_query = posT[:, :T].T                                     # (T, P)
    temp_query = tempT[:, :T].T                                   # (T, D)
    return pos_query, temp_query


# ----------------------------------------------------------------------------
# Pure-JAX reference (mirrors the PyTorch forward exactly)
# ----------------------------------------------------------------------------
def reference_forward(frames_cls, videos_cls, durations, params):
    def linear(x, W, b):
        return x @ W.T + b

    content_query = linear(videos_cls, params["Wc"], params["bc"])
    offsets = np.concatenate([[0], np.cumsum(np.asarray(durations))])
    pos_list, temp_list = [], []
    for i_b in range(len(durations)):
        f = frames_cls[offsets[i_b]:offsets[i_b + 1]]
        v = videos_cls[i_b]
        gamma_vec = jnp.tanh(linear(v, params["Wg"], params["bg"]))
        beta_vec = jnp.tanh(linear(v, params["Wb"], params["bb"]))
        pos_list.append(linear(gamma_vec * f + beta_vec,
                               params["Wa"], params["ba"]))
        temp_list.append(jnp.tile(content_query[i_b][None, :], (f.shape[0], 1)))
    return jnp.concatenate(pos_list, 0), jnp.concatenate(temp_list, 0)


# ----------------------------------------------------------------------------
if __name__ == "__main__":
    D_MODEL = 32          # cfg.MODEL.STCAT.HIDDEN
    POS_QUERY_DIM = 4     # cfg.MODEL.STCAT.QUERY_DIM
    durations = [5, 3]    # two videos -> T = 8 frames total
    B = len(durations)
    T = sum(durations)

    key = jax.random.PRNGKey(0)
    keys = jax.random.split(key, 10)

    def init_linear(kw, kb, out_dim, in_dim):
        bound = 1.0 / np.sqrt(in_dim)
        W = jax.random.uniform(kw, (out_dim, in_dim), jnp.float32, -bound, bound)
        b = jax.random.uniform(kb, (out_dim,), jnp.float32, -bound, bound)
        return W, b

    Wc, bc = init_linear(keys[0], keys[1], D_MODEL, D_MODEL)        # content_proj
    Wg, bg = init_linear(keys[2], keys[3], D_MODEL, D_MODEL)        # gamma_proj
    Wb, bb = init_linear(keys[4], keys[5], D_MODEL, D_MODEL)        # beta_proj
    Wa, ba = init_linear(keys[6], keys[7], POS_QUERY_DIM, D_MODEL)  # anchor_proj
    params = dict(Wc=Wc, bc=bc, Wg=Wg, bg=bg, Wb=Wb, bb=bb, Wa=Wa, ba=ba)

    frames_cls = jax.random.normal(keys[8], (T, D_MODEL), jnp.float32)
    videos_cls = jax.random.normal(keys[9], (B, D_MODEL), jnp.float32)

    pos_q, temp_q = template_generator_forward(frames_cls, videos_cls,
                                               durations, params)
    jax.block_until_ready((pos_q, temp_q))

    pos_ref, temp_ref = reference_forward(frames_cls, videos_cls,
                                          durations, params)

    assert pos_q.shape == (T, POS_QUERY_DIM), pos_q.shape
    assert temp_q.shape == (T, D_MODEL), temp_q.shape
    np.testing.assert_allclose(np.asarray(pos_q), np.asarray(pos_ref),
                               rtol=1e-5, atol=1e-5)
    np.testing.assert_allclose(np.asarray(temp_q), np.asarray(temp_ref),
                               rtol=1e-5, atol=1e-5)
    print("KERNEL_OK")
</pallas_src>

<mosaic_0001>
module attributes {stable_mosaic.version = 11 : i64} {
  func.func @_template_kernel(%arg0: i32, %arg1: memref<1x128xi32, #tpu.memory_space<vmem>>, %arg2: memref<32x8xf32, #tpu.memory_space<vmem>>, %arg3: memref<96x32xf32, #tpu.memory_space<vmem>>, %arg4: memref<96x1xf32, #tpu.memory_space<vmem>>, %arg5: memref<4x32xf32, #tpu.memory_space<vmem>>, %arg6: memref<4x1xf32, #tpu.memory_space<vmem>>, %arg7: memref<32x128xf32, #tpu.memory_space<vmem>>, %arg8: memref<4x128xf32, #tpu.memory_space<vmem>>, %arg9: memref<32x128xf32, #tpu.memory_space<vmem>>) attributes {dimension_semantics = [#tpu.dimension_semantics<parallel>], iteration_bounds = array<i64: 1>, scalar_prefetch = 0 : i64, scratch_operands = 0 : i64, tpu.core_type = #tpu.core_type<tc>, window_params = [{transform_indices = @transform_0, window_bounds = array<i64: 1, 128>}, {pipeline_mode = #tpu.pipeline_mode<synchronous>, transform_indices = @transform_1, window_bounds = array<i64: 32, 8>}, {pipeline_mode = #tpu.pipeline_mode<synchronous>, transform_indices = @transform_2, window_bounds = array<i64: 96, 32>}, {pipeline_mode = #tpu.pipeline_mode<synchronous>, transform_indices = @transform_3, window_bounds = array<i64: 96, 1>}, {pipeline_mode = #tpu.pipeline_mode<synchronous>, transform_indices = @transform_4, window_bounds = array<i64: 4, 32>}, {pipeline_mode = #tpu.pipeline_mode<synchronous>, transform_indices = @transform_5, window_bounds = array<i64: 4, 1>}, {transform_indices = @transform_6, window_bounds = array<i64: 32, 128>}, {transform_indices = @transform_7, window_bounds = array<i64: 4, 128>}, {transform_indices = @transform_8, window_bounds = array<i64: 32, 128>}]} {
    %c0 = arith.constant 0 : index
    %c0_0 = arith.constant 0 : index
    %0 = vector.load %arg3[%c0, %c0_0] : memref<96x32xf32, #tpu.memory_space<vmem>>, vector<96x32xf32>
    %c0_1 = arith.constant 0 : index
    %c0_2 = arith.constant 0 : index
    %1 = vector.load %arg2[%c0_1, %c0_2] : memref<32x8xf32, #tpu.memory_space<vmem>>, vector<32x8xf32>
    %cst = arith.constant dense<0.000000e+00> : vector<96x8xf32>
    %2 = tpu.matmul %0, %1, %cst {dimension_numbers = #tpu.dot_dimension_numbers<[1], [0], [0], [1], [0, 0, 1, 1], [], []>} : vector<96x32xf32>, vector<32x8xf32>, vector<96x8xf32> -> vector<96x8xf32>
    %c0_3 = arith.constant 0 : index
    %c0_4 = arith.constant 0 : index
    %3 = vector.load %arg4[%c0_3, %c0_4] : memref<96x1xf32, #tpu.memory_space<vmem>>, vector<96x1xf32>
    %4 = vector.broadcast %3 : vector<96x1xf32> to vector<96x8xf32>
    %5 = arith.addf %2, %4 : vector<96x8xf32>
    %6 = tpu.iota {dimensions = array<i32: 0>} : vector<96x8xi32>
    %c64_i32 = arith.constant 64 : i32
    %7 = vector.broadcast %c64_i32 : i32 to vector<96x8xi32>
    %8 = arith.cmpi slt, %6, %7 : vector<96x8xi32>
    %9 = math.tanh %5 : vector<96x8xf32>
    %10 = arith.select %8, %9, %5 : vector<96x8xi1>, vector<96x8xf32>
    %c0_5 = arith.constant 0 : index
    %c0_6 = arith.constant 0 : index
    %11 = vector.load %arg1[%c0_5, %c0_6] : memref<1x128xi32, #tpu.memory_space<vmem>>, vector<1x128xi32>
    %12 = tpu.iota {dimensions = array<i32: 0>} : vector<8x128xi32>
    %13 = vector.broadcast %11 : vector<1x128xi32> to vector<8x128xi32>
    %14 = arith.cmpi eq, %12, %13 : vector<8x128xi32>
    %15 = arith.extui %14 : vector<8x128xi1> to vector<8x128xi32>
    %16 = arith.sitofp %15 : vector<8x128xi32> to vector<8x128xf32>
    %cst_7 = arith.constant dense<0.000000e+00> : vector<96x128xf32>
    %17 = tpu.matmul %10, %16, %cst_7 {dimension_numbers = #tpu.dot_dimension_numbers<[1], [0], [0], [1], [0, 0, 1, 1], [], []>} : vector<96x8xf32>, vector<8x128xf32>, vector<96x128xf32> -> vector<96x128xf32>
    %18 = vector.extract_strided_slice %17 {offsets = [0, 0], sizes = [32, 128], strides = [1, 1]} : vector<96x128xf32> to vector<32x128xf32>
    %19 = vector.extract_strided_slice %17 {offsets = [32, 0], sizes = [32, 128], strides = [1, 1]} : vector<96x128xf32> to vector<32x128xf32>
    %20 = vector.extract_strided_slice %17 {offsets = [64, 0], sizes = [32, 128], strides = [1, 1]} : vector<96x128xf32> to vector<32x128xf32>
    %c0_8 = arith.constant 0 : index
    %c0_9 = arith.constant 0 : index
    %21 = vector.load %arg9[%c0_8, %c0_9] : memref<32x128xf32, #tpu.memory_space<vmem>>, vector<32x128xf32>
    tpu.vector_store %arg9[%c0_8, %c0_9], %20 {strides = array<i32>} : memref<32x128xf32, #tpu.memory_space<vmem>>, vector<32x128xf32>,
    %c0_10 = arith.constant 0 : index
    %c0_11 = arith.constant 0 : index
    %22 = vector.load %arg7[%c0_10, %c0_11] : memref<32x128xf32, #tpu.memory_space<vmem>>, vector<32x128xf32>
    %23 = arith.mulf %18, %22 : vector<32x128xf32>
    %24 = arith.addf %23, %19 : vector<32x128xf32>
    %c0_12 = arith.constant 0 : index
    %c0_13 = arith.constant 0 : index
    %25 = vector.load %arg5[%c0_12, %c0_13] : memref<4x32xf32, #tpu.memory_space<vmem>>, vector<4x32xf32>
    %cst_14 = arith.constant dense<0.000000e+00> : vector<4x128xf32>
    %26 = tpu.matmul %25, %24, %cst_14 {dimension_numbers = #tpu.dot_dimension_numbers<[1], [0], [0], [1], [0, 0, 1, 1], [], []>} : vector<4x32xf32>, vector<32x128xf32>, vector<4x128xf32> -> vector<4x128xf32>
    %c0_15 = arith.constant 0 : index
    %c0_16 = arith.constant 0 : index
    %27 = vector.load %arg6[%c0_15, %c0_16] : memref<4x1xf32, #tpu.memory_space<vmem>>, vector<4x1xf32>
    %28 = vector.broadcast %27 : vector<4x1xf32> to vector<4x128xf32>
    %29 = arith.addf %26, %28 : vector<4x128xf32>
    %c0_17 = arith.constant 0 : index
    %c0_18 = arith.constant 0 : index
    %30 = vector.load %arg8[%c0_17, %c0_18] : memref<4x128xf32, #tpu.memory_space<vmem>>, vector<4x128xf32>
    tpu.vector_store %arg8[%c0_17, %c0_18], %29 {strides = array<i32>} : memref<4x128xf32, #tpu.memory_space<vmem>>, vector<4x128xf32>,
    return
  }
  func.func @transform_0(%arg0: i32) -> (i32, i32) {
    %c0_i32 = arith.constant 0 : i32
    %c0_i32_0 = arith.constant 0 : i32
    return %c0_i32, %arg0 : i32, i32
  }
  func.func @transform_1(%arg0: i32) -> (i32, i32) {
    %c0_i32 = arith.constant 0 : i32
    %c0_i32_0 = arith.constant 0 : i32
    %c0_i32_1 = arith.constant 0 : i32
    return %c0_i32, %c0_i32_0 : i32, i32
  }
  func.func @transform_2(%arg0: i32) -> (i32, i32) {
    %c0_i32 = arith.constant 0 : i32
    %c0_i32_0 = arith.constant 0 : i32
    %c0_i32_1 = arith.constant 0 : i32
    return %c0_i32, %c0_i32_0 : i32, i32
  }
  func.func @transform_3(%arg0: i32) -> (i32, i32) {
    %c0_i32 = arith.constant 0 : i32
    %c0_i32_0 = arith.constant 0 : i32
    %c0_i32_1 = arith.constant 0 : i32
    return %c0_i32, %c0_i32_0 : i32, i32
  }
  func.func @transform_4(%arg0: i32) -> (i32, i32) {
    %c0_i32 = arith.constant 0 : i32
    %c0_i32_0 = arith.constant 0 : i32
    %c0_i32_1 = arith.constant 0 : i32
    return %c0_i32, %c0_i32_0 : i32, i32
  }
  func.func @transform_5(%arg0: i32) -> (i32, i32) {
    %c0_i32 = arith.constant 0 : i32
    %c0_i32_0 = arith.constant 0 : i32
    %c0_i32_1 = arith.constant 0 : i32
    return %c0_i32, %c0_i32_0 : i32, i32
  }
  func.func @transform_6(%arg0: i32) -> (i32, i32) {
    %c0_i32 = arith.constant 0 : i32
    %c0_i32_0 = arith.constant 0 : i32
    return %c0_i32, %arg0 : i32, i32
  }
  func.func @transform_7(%arg0: i32) -> (i32, i32) {
    %c0_i32 = arith.constant 0 : i32
    %c0_i32_0 = arith.constant 0 : i32
    return %c0_i32, %arg0 : i32, i32
  }
  func.func @transform_8(%arg0: i32) -> (i32, i32) {
    %c0_i32 = arith.constant 0 : i32
    %c0_i32_0 = arith.constant 0 : i32
    return %c0_i32, %arg0 : i32, i32
  }
}

</mosaic_0001>

<llo_original>
// kernel: tpu_custom_call.1
$region0: #{tpu_custom_call.1}
  #allocation0 [shape = 'u32[]', space=smem, size = 0x4, offset = 0x4, fixed_abs, tag = 'smem constant byte address 0x4 - core index']
  #allocation1 [shape = 'u32[72,128]{1,0:T(1,128)}', space=vmem, size = 0x9000, scoped, tag = 'internal scratch']
  %s0 = inlined_call_operand.vmem [shape: s32[1,128], index: 0, kind: input, shape index: {}]
  %s1 = inlined_call_operand.vmem [shape: f32[32,8], index: 1, kind: input, shape index: {}]
  %s2 = inlined_call_operand.vmem [shape: f32[96,32], index: 2, kind: input, shape index: {}]
  %s3 = inlined_call_operand.vmem [shape: f32[96,1], index: 3, kind: input, shape index: {}]
  %s4 = inlined_call_operand.vmem [shape: f32[4,32], index: 4, kind: input, shape index: {}]
  %s5 = inlined_call_operand.vmem [shape: f32[4,1], index: 5, kind: input, shape index: {}]
  %s6 = inlined_call_operand.vmem [shape: f32[32,128], index: 6, kind: input, shape index: {}]
  %s7 = inlined_call_operand.hbm [shape: f32[4,128], index: 7, kind: output, shape index: {0}]
  %s8 = inlined_call_operand.hbm [shape: f32[32,128], index: 8, kind: output, shape index: {1}]
  %9 = xla_tuple %s7, %s8
  %s10 = sld [smem:[#allocation0]]
  $region46: #{tpu_custom_call.1} parent=0
    _
  %s12 = ssub.s32 1, %s10
  %s13 = scalar_select 0, %s12, %s10
  $region1: #{tpu_custom_call.1} parent=0
    #allocation2 [shape = 'u8[2048]{0}', space=vmem, size = 0x800, scoped, tag = 'output window, operand 0, single buffered']
    #allocation3 [shape = 's32[1]{0}', space=sflag, size = 0x4, scoped, tag = 'scoped memory for tpu_custom_call.1']
    #allocation4 [shape = 'u8[16384]{0}', space=vmem, size = 0x4000, scoped, tag = 'output window, operand 1, single buffered']
    #allocation5 [shape = 's32[1]{0}', space=sflag, size = 0x4, scoped, tag = 'scoped memory for tpu_custom_call.1']
    %14 = vsyncpa [#allocation3], 0
    %15 = vsyncpa [#allocation5], 0
    // Predicated region
    $region2: #{tpu_custom_call.1} parent=1 // pred_check
      _
    $region3: #{tpu_custom_call.1} parent=1 // pred_check_branch
      %17 = sbr.rel (0) target = $region5
    $region4: #{tpu_custom_call.1} parent=1 // pred_region
      _
    $region5: #{tpu_custom_call.1} parent=1 // pred_fallthru
      _
    // Predicated region
    $region6: #{tpu_custom_call.1} parent=1 // pred_check
      _
    $region7: #{tpu_custom_call.1} parent=1 // pred_check_branch
      %19 = sbr.rel (0) target = $region9
    $region8: #{tpu_custom_call.1} parent=1 // pred_region
      _
    $region9: #{tpu_custom_call.1} parent=1 // pred_fallthru
      _
    // Predicated region
    $region10: #{tpu_custom_call.1} parent=1 // pred_check
      _
    $region11: #{tpu_custom_call.1} parent=1 // pred_check_branch
      %21 = sbr.rel (0) target = $region13
    $region12: #{tpu_custom_call.1} parent=1 // pred_region
      _
    $region13: #{tpu_custom_call.1} parent=1 // pred_fallthru
      _
    // Predicated region
    $region14: #{tpu_custom_call.1} parent=1 // pred_check
      _
    $region15: #{tpu_custom_call.1} parent=1 // pred_check_branch
      %23 = sbr.rel (0) target = $region17
    $region16: #{tpu_custom_call.1} parent=1 // pred_region
      _
    $region17: #{tpu_custom_call.1} parent=1 // pred_fallthru
      _
    // Predicated region
    $region18: #{tpu_custom_call.1} parent=1 // pred_check
      _
    $region19: #{tpu_custom_call.1} parent=1 // pred_check_branch
      %25 = sbr.rel (0) target = $region21
    $region20: #{tpu_custom_call.1} parent=1 // pred_region
      _
    $region21: #{tpu_custom_call.1} parent=1 // pred_fallthru
      _
    // Predicated region
    $region22: #{tpu_custom_call.1} parent=1 // pred_check
      _
    $region23: #{tpu_custom_call.1} parent=1 // pred_check_branch
      %27 = sbr.rel (0) target = $region25
    $region24: #{tpu_custom_call.1} parent=1 // pred_region
      _
    $region25: #{tpu_custom_call.1} parent=1 // pred_fallthru
      _
    // Predicated region
    $region26: #{tpu_custom_call.1} parent=1 // pred_check
      _
    $region27: #{tpu_custom_call.1} parent=1 // pred_check_branch
      %29 = sbr.rel (0) target = $region29
    $region28: #{tpu_custom_call.1} parent=1 // pred_region
      _
    $region29: #{tpu_custom_call.1} parent=1 // pred_fallthru
      _
    %v30 = vld [vmem:[%s2] sm:$0xff]
    %v31 = vld [vmem:[%s2 + $0x8] sm:$0xff]
    %v32 = vld [vmem:[%s2 + $0x10] sm:$0xff]
    %v33 = vld [vmem:[%s2 + $0x18] sm:$0xff]
    %v34 = vld [vmem:[%s2 + $0x20] sm:$0xff]
    %v35 = vld [vmem:[%s2 + $0x28] sm:$0xff]
    %v36 = vld [vmem:[%s2 + $0x30] sm:$0xff]
    %v37 = vld [vmem:[%s2 + $0x38] sm:$0xff]
    %v38 = vld [vmem:[%s2 + $0x40] sm:$0xff]
    %v39 = vld [vmem:[%s2 + $0x48] sm:$0xff]
    %v40 = vld [vmem:[%s2 + $0x50] sm:$0xff]
    %v41 = vld [vmem:[%s2 + $0x58] sm:$0xff]
    %v42 = vld [vmem:[%s1] sm:$0xff]
    %v43 = vld [vmem:[%s1 + $0x8] sm:$0xff]
    %v44 = vld [vmem:[%s1 + $0x10] sm:$0xff]
    %v45 = vld [vmem:[%s1 + $0x18] sm:$0xff]
    %v46 = vld [vmem:[%s3] sm:$0xff]
    %v47 = vld [vmem:[%s3 + $0x8] sm:$0xff]
    %v48 = vld [vmem:[%s3 + $0x10] sm:$0xff]
    %v49 = vld [vmem:[%s3 + $0x18] sm:$0xff]
    %v50 = vld [vmem:[%s3 + $0x20] sm:$0xff]
    %v51 = vld [vmem:[%s3 + $0x28] sm:$0xff]
    %v52 = vld [vmem:[%s3 + $0x30] sm:$0xff]
    %v53 = vld [vmem:[%s3 + $0x38] sm:$0xff]
    %v54 = vld [vmem:[%s3 + $0x40] sm:$0xff]
    %v55 = vld [vmem:[%s3 + $0x48] sm:$0xff]
    %v56 = vld [vmem:[%s3 + $0x50] sm:$0xff]
    %v57 = vld [vmem:[%s3 + $0x58] sm:$0xff]
    %59 = vset.pattern.permute.xlu0 0
    %60 = vperm.xlu0 %59, %v46
    %v61 = vpop.permute.xlu0 %60
    %64 = vset.pattern.permute.xlu0 0
    %65 = vperm.xlu0 %64, %v47
    %v66 = vpop.permute.xlu0 %65
    %69 = vset.pattern.permute.xlu0 0
    %70 = vperm.xlu0 %69, %v48
    %v71 = vpop.permute.xlu0 %70
    %74 = vset.pattern.permute.xlu0 0
    %75 = vperm.xlu0 %74, %v49
    %v76 = vpop.permute.xlu0 %75
    %79 = vset.pattern.permute.xlu0 0
    %80 = vperm.xlu0 %79, %v50
    %v81 = vpop.permute.xlu0 %80
    %84 = vset.pattern.permute.xlu0 0
    %85 = vperm.xlu0 %84, %v51
    %v86 = vpop.permute.xlu0 %85
    %89 = vset.pattern.permute.xlu0 0
    %90 = vperm.xlu0 %89, %v52
    %v91 = vpop.permute.xlu0 %90
    %94 = vset.pattern.permute.xlu0 0
    %95 = vperm.xlu0 %94, %v53
    %v96 = vpop.permute.xlu0 %95
    %99 = vset.pattern.permute.xlu0 0
    %100 = vperm.xlu0 %99, %v54
    %v101 = vpop.permute.xlu0 %100
    %104 = vset.pattern.permute.xlu0 0
    %105 = vperm.xlu0 %104, %v55
    %v106 = vpop.permute.xlu0 %105
    %109 = vset.pattern.permute.xlu0 0
    %110 = vperm.xlu0 %109, %v56
    %v111 = vpop.permute.xlu0 %110
    %114 = vset.pattern.permute.xlu0 0
    %115 = vperm.xlu0 %114, %v57
    %v116 = vpop.permute.xlu0 %115
    %vm118 = vcmask 261120
    %v120 = vsel %vm118, %v30, 0
    %v123 = vsel %vm118, %v31, 0
    %v126 = vsel %vm118, %v32, 0
    %v129 = vsel %vm118, %v33, 0
    %v132 = vsel %vm118, %v34, 0
    %v135 = vsel %vm118, %v35, 0
    %v138 = vsel %vm118, %v36, 0
    %v141 = vsel %vm118, %v37, 0
    %v144 = vsel %vm118, %v38, 0
    %v147 = vsel %vm118, %v39, 0
    %v150 = vsel %vm118, %v40, 0
    %v153 = vsel %vm118, %v41, 0
    %155 = vmatpush.msra.mxu0 0.0
    %156 = vmatpush.msra.mxu0 0.0
    %157 = vmatpush.msra.mxu0 0.0
    %158 = vmatpush.msra.mxu0 0.0
    %159 = vmatpush.msra.mxu0 0.0
    %160 = vmatpush.msra.mxu0 0.0
    %161 = vmatpush.msra.mxu0 0.0
    %162 = vmatpush.msra.mxu0 0.0
    %163 = vmatpush.msra.mxu0 0.0
    %164 = vmatpush.msra.mxu0 0.0
    %165 = vmatpush.msra.mxu0 0.0
    %166 = vmatpush.msra.mxu0 0.0
    %167 = vmatpush.msra.mxu0 %v45
    %168 = vmatpush.msra.mxu0 %v44
    %169 = vmatpush.msra.mxu0 %v43
    %170 = vmatpush.msra.mxu0 %v42
    %171 = vmatmul.f32.gmra.mxu0 %v120
    %v172 = vpop.f32.mrf.mxu0
    %v173 = vadd.f32 %v61, %v172
    %174 = vmatmul.f32.gmra.mxu0 %v123
    %v175 = vpop.f32.mrf.mxu0
    %v176 = vadd.f32 %v66, %v175
    %177 = vmatmul.f32.gmra.mxu0 %v126
    %v178 = vpop.f32.mrf.mxu0
    %v179 = vadd.f32 %v71, %v178
    %180 = vmatmul.f32.gmra.mxu0 %v129
    %v181 = vpop.f32.mrf.mxu0
    %v182 = vadd.f32 %v76, %v181
    %183 = vmatmul.f32.gmra.mxu0 %v132
    %v184 = vpop.f32.mrf.mxu0
    %v185 = vadd.f32 %v81, %v184
    %186 = vmatmul.f32.gmra.mxu0 %v135
    %v187 = vpop.f32.mrf.mxu0
    %v188 = vadd.f32 %v86, %v187
    %189 = vmatmul.f32.gmra.mxu0 %v138
    %v190 = vpop.f32.mrf.mxu0
    %v191 = vadd.f32 %v91, %v190
    %192 = vmatmul.f32.gmra.mxu0 %v141
    %v193 = vpop.f32.mrf.mxu0
    %v194 = vadd.f32 %v96, %v193
    %195 = vmatmul.f32.gmra.mxu0 %v144
    %v196 = vpop.f32.mrf.mxu0
    %v197 = vadd.f32 %v101, %v196
    %198 = vmatmul.f32.gmra.mxu0 %v147
    %v199 = vpop.f32.mrf.mxu0
    %v200 = vadd.f32 %v106, %v199
    %201 = vmatmul.f32.gmra.mxu0 %v150
    %v202 = vpop.f32.mrf.mxu0
    %v203 = vadd.f32 %v111, %v202
    %204 = vmatmul.f32.gmra.mxu0 %v153
    %v205 = vpop.f32.mrf.mxu0
    %v206 = vadd.f32 %v116, %v205
    %207 = vdwg.mxu0
    %v208 = vlaneseq
    %v209 = vshrl.u32 %v208, 7
    %v210 = vadd.s32 %v209, 8
    %v211 = vadd.s32 %v209, 16
    %v212 = vadd.s32 %v209, 24
    %v213 = vadd.s32 %v209, 32
    %v214 = vadd.s32 %v209, 40
    %v215 = vadd.s32 %v209, 48
    %v216 = vadd.s32 %v209, 56
    %v217 = vadd.s32 %v209, 64
    %v218 = vadd.s32 %v209, 72
    %v219 = vadd.s32 %v209, 80
    %v220 = vadd.s32 %v209, 88
    %vm221 = vcmp.lt.s32.totalorder %v209, 64
    %vm222 = vcmp.lt.s32.totalorder %v210, 64
    %vm223 = vcmp.lt.s32.totalorder %v211, 64
    %vm224 = vcmp.lt.s32.totalorder %v212, 64
    %vm225 = vcmp.lt.s32.totalorder %v213, 64
    %vm226 = vcmp.lt.s32.totalorder %v214, 64
    %vm227 = vcmp.lt.s32.totalorder %v215, 64
    %vm228 = vcmp.lt.s32.totalorder %v216, 64
    %vm229 = vcmp.lt.s32.totalorder %v217, 64
    %vm230 = vcmp.lt.s32.totalorder %v218, 64
    %vm231 = vcmp.lt.s32.totalorder %v219, 64
    %vm232 = vcmp.lt.s32.totalorder %v220, 64
    %v233 = vtanh.pop %v173
    %v234 = vtanh.pop %v176
    %v235 = vtanh.pop %v179
    %v236 = vtanh.pop %v182
    %v237 = vtanh.pop %v185
    %v238 = vtanh.pop %v188
    %v239 = vtanh.pop %v191
    %v240 = vtanh.pop %v194
    %v241 = vtanh.pop %v197
    %v242 = vtanh.pop %v200
    %v243 = vtanh.pop %v203
    %v244 = vtanh.pop %v206
    %v245 = vsel %vm221, %v233, %v173
    %v246 = vsel %vm222, %v234, %v176
    %v247 = vsel %vm223, %v235, %v179
    %v248 = vsel %vm224, %v236, %v182
    %v249 = vsel %vm225, %v237, %v185
    %v250 = vsel %vm226, %v238, %v188
    %v251 = vsel %vm227, %v239, %v191
    %v252 = vsel %vm228, %v240, %v194
    %v253 = vsel %vm229, %v241, %v197
    %v254 = vsel %vm230, %v242, %v200
    %v255 = vsel %vm231, %v243, %v203
    %v256 = vsel %vm232, %v244, %v206
    %v257 = vld [vmem:[%s0] sm:$0x1]
    %v258 = vperm.slane %v257, 0
    %vm259 = vcmp.eq.s32.totalorder %v209, %v258
    %v260 = vsel %vm259, 1, 0
    %v261 = vcvt.s32.f32 %v260
    %vm262 = vcmask 64512
    %v264 = vsel %vm262, %v245, 0
    %v267 = vsel %vm262, %v246, 0
    %v270 = vsel %vm262, %v247, 0
    %v273 = vsel %vm262, %v248, 0
    %v276 = vsel %vm262, %v249, 0
    %v279 = vsel %vm262, %v250, 0
    %v282 = vsel %vm262, %v251, 0
    %v285 = vsel %vm262, %v252, 0
    %v288 = vsel %vm262, %v253, 0
    %v291 = vsel %vm262, %v254, 0
    %v294 = vsel %vm262, %v255, 0
    %v297 = vsel %vm262, %v256, 0
    %299 = vmatpush.msra.mxu0 0.0
    %300 = vmatpush.msra.mxu0 0.0
    %301 = vmatpush.msra.mxu0 0.0
    %302 = vmatpush.msra.mxu0 0.0
    %303 = vmatpush.msra.mxu0 0.0
    %304 = vmatpush.msra.mxu0 0.0
    %305 = vmatpush.msra.mxu0 0.0
    %306 = vmatpush.msra.mxu0 0.0
    %307 = vmatpush.msra.mxu0 0.0
    %308 = vmatpush.msra.mxu0 0.0
    %309 = vmatpush.msra.mxu0 0.0
    %310 = vmatpush.msra.mxu0 0.0
    %311 = vmatpush.msra.mxu0 0.0
    %312 = vmatpush.msra.mxu0 0.0
    %313 = vmatpush.msra.mxu0 0.0
    %314 = vmatpush.msra.mxu0 %v261
    %315 = vmatmul.f32.gmra.mxu0 %v264
    %v316 = vpop.f32.mrf.mxu0
    %v317 = vadd.f32 0.0, %v316
    %318 = vmatmul.f32.gmra.mxu0 %v267
    %v319 = vpop.f32.mrf.mxu0
    %v320 = vadd.f32 0.0, %v319
    %321 = vmatmul.f32.gmra.mxu0 %v270
    %v322 = vpop.f32.mrf.mxu0
    %v323 = vadd.f32 0.0, %v322
    %324 = vmatmul.f32.gmra.mxu0 %v273
    %v325 = vpop.f32.mrf.mxu0
    %v326 = vadd.f32 0.0, %v325
    %327 = vmatmul.f32.gmra.mxu0 %v276
    %v328 = vpop.f32.mrf.mxu0
    %v329 = vadd.f32 0.0, %v328
    %330 = vmatmul.f32.gmra.mxu0 %v279
    %v331 = vpop.f32.mrf.mxu0
    %v332 = vadd.f32 0.0, %v331
    %333 = vmatmul.f32.gmra.mxu0 %v282
    %v334 = vpop.f32.mrf.mxu0
    %v335 = vadd.f32 0.0, %v334
    %336 = vmatmul.f32.gmra.mxu0 %v285
    %v337 = vpop.f32.mrf.mxu0
    %v338 = vadd.f32 0.0, %v337
    %339 = vmatmul.f32.gmra.mxu0 %v288
    %v340 = vpop.f32.mrf.mxu0
    %v341 = vadd.f32 0.0, %v340
    %342 = vmatmul.f32.gmra.mxu0 %v291
    %v343 = vpop.f32.mrf.mxu0
    %v344 = vadd.f32 0.0, %v343
    %345 = vmatmul.f32.gmra.mxu0 %v294
    %v346 = vpop.f32.mrf.mxu0
    %v347 = vadd.f32 0.0, %v346
    %348 = vmatmul.f32.gmra.mxu0 %v297
    %v349 = vpop.f32.mrf.mxu0
    %v350 = vadd.f32 0.0, %v349
    %351 = vdwg.mxu0
    %352 = vst [vmem:[#allocation4] sm:$0xff] %v341
    %353 = vst [vmem:[#allocation4 + $0x8] sm:$0xff] %v344
    %354 = vst [vmem:[#allocation4 + $0x10] sm:$0xff] %v347
    %355 = vst [vmem:[#allocation4 + $0x18] sm:$0xff] %v350
    %v356 = vld [vmem:[%s6] sm:$0xff]
    %v357 = vld [vmem:[%s6 + $0x8] sm:$0xff]
    %v358 = vld [vmem:[%s6 + $0x10] sm:$0xff]
    %v359 = vld [vmem:[%s6 + $0x18] sm:$0xff]
    %v360 = vmul.f32 %v317, %v356
    %v361 = vmul.f32 %v320, %v357
    %v362 = vmul.f32 %v323, %v358
    %v363 = vmul.f32 %v326, %v359
    %v364 = vadd.f32 %v360, %v329
    %v365 = vadd.f32 %v361, %v332
    %v366 = vadd.f32 %v362, %v335
    %v367 = vadd.f32 %v363, %v338
    %v368 = vld [vmem:[%s4] sm:$0xf]
    %v369 = vld [vmem:[%s5] sm:$0xf]
    %371 = vset.pattern.permute.xlu0 0
    %372 = vperm.xlu0 %371, %v369
    %v373 = vpop.permute.xlu0 %372
    %v376 = vsel %vm118, %v368, 0
    %378 = vmatpush.msra.mxu0 0.0
    %379 = vmatpush.msra.mxu0 0.0
    %380 = vmatpush.msra.mxu0 0.0
    %381 = vmatpush.msra.mxu0 0.0
    %382 = vmatpush.msra.mxu0 0.0
    %383 = vmatpush.msra.mxu0 0.0
    %384 = vmatpush.msra.mxu0 0.0
    %385 = vmatpush.msra.mxu0 0.0
    %386 = vmatpush.msra.mxu0 0.0
    %387 = vmatpush.msra.mxu0 0.0
    %388 = vmatpush.msra.mxu0 0.0
    %389 = vmatpush.msra.mxu0 0.0
    %390 = vmatpush.msra.mxu0 %v367
    %391 = vmatpush.msra.mxu0 %v366
    %392 = vmatpush.msra.mxu0 %v365
    %393 = vmatpush.msra.mxu0 %v364
    %394 = vmatmul.f32.gmra.mxu0 %v376
    %v395 = vpop.f32.mrf.mxu0
    %v396 = vadd.f32 %v373, %v395
    %397 = vdwg.mxu0
    %398 = vst [vmem:[#allocation2] sm:$0xf] %v396
    // Predicated region
    $region30: #{tpu_custom_call.1} parent=1 // pred_check
      _
    $region31: #{tpu_custom_call.1} parent=1 // pred_check_branch
      %400 = sbr.rel (0) target = $region33
    $region32: #{tpu_custom_call.1} parent=1 // pred_region
      %402 = vsyncadd [#allocation3], 0
      %s404 = sshll.u32 [#allocation2], 4
      %s405 = int_to_ptr.vmem [resolvable:$true] %s404
      %s406 = sshll.u32 %s7, 4
      %s407 = int_to_ptr.hbm [resolvable:$true] %s406
      %409 = dma.vmem_to_hbm [thread:$0]  %s405, 64, %s407, [#allocation3]
    $region33: #{tpu_custom_call.1} parent=1 // pred_fallthru
      _
    // Predicated region
    $region34: #{tpu_custom_call.1} parent=1 // pred_check
      _
    $region35: #{tpu_custom_call.1} parent=1 // pred_check_branch
      %411 = sbr.rel (0) target = $region37
    $region36: #{tpu_custom_call.1} parent=1 // pred_region
      %413 = vsyncadd [#allocation5], 0
      %s414 = sshll.u32 [#allocation4], 4
      %s415 = int_to_ptr.vmem [resolvable:$true] %s414
      %s416 = sshll.u32 %s8, 4
      %s417 = int_to_ptr.hbm [resolvable:$true] %s416
      %422 = dma.vmem_to_hbm [thread:$0]  %s415, 512, %s417, [#allocation5], 128, 128, 8
    $region37: #{tpu_custom_call.1} parent=1 // pred_fallthru
      _
    // Predicated region
    $region38: #{tpu_custom_call.1} parent=1 // pred_check
      _
    $region39: #{tpu_custom_call.1} parent=1 // pred_check_branch
      %424 = sbr.rel (0) target = $region41
    $region40: #{tpu_custom_call.1} parent=1 // pred_region
      %426 = dma.done [#allocation3], 64
    $region41: #{tpu_custom_call.1} parent=1 // pred_fallthru
      _
    // Predicated region
    $region42: #{tpu_custom_call.1} parent=1 // pred_check
      _
    $region43: #{tpu_custom_call.1} parent=1 // pred_check_branch
      %428 = sbr.rel (0) target = $region45
    $region44: #{tpu_custom_call.1} parent=1 // pred_region
      %430 = dma.done [#allocation5], 512
    $region45: #{tpu_custom_call.1} parent=1 // pred_fallthru
      _
    %431 = vsyncpa [#allocation3], 1
    %432 = vsyncpa [#allocation5], 1

</llo_original>
